<compile_context>
chip_gen: v5e
topology: v5e:2x2
jax: 0.10.0
libtpu: 0.0.40
codegen_flags: <defaults>
</compile_context>

<pallas_src>
import functools

import jax
import jax.numpy as jnp
from jax.experimental import pallas as pl
from jax.experimental.pallas import tpu as pltpu

_LANES = 128
_FUSED_BLOCK_ROWS = 4096   # 4096*128*4B = 2 MiB f32 tile (streaming fused path)
_TILED_BLOCK_ROWS = 8192   # 8192*128*4B = 4 MiB f32 tile (two-pass path)
_MIB = 1024 * 1024


def _vmem_limit_bytes():
    """Generation-aware scoped-VMEM budget (~3/4 of physical per-core VMEM)."""
    cap = None
    try:
        info = pltpu.get_tpu_info()
        for name in ("vmem_capacity_bytes", "vmem_size_bytes", "vmem_bytes"):
            cap = getattr(info, name, None)
            if cap:
                break
    except Exception:
        cap = None
    if not cap:
        cap = 64 * _MIB  # conservative fallback: v7x per-TensorCore VMEM
    return max(32 * _MIB, (int(cap) * 3) // 4)


def _valid_mask(shape, block_row0, full_rows, tail_lanes):
    """Mask of 'real' elements for a block whose first row is block_row0."""
    row = jax.lax.broadcasted_iota(jnp.int32, shape, 0) + block_row0
    lane = jax.lax.broadcasted_iota(jnp.int32, shape, 1)
    return (row < full_rows) | ((row == full_rows) & (lane < tail_lanes))


# ---------------------------------------------------------------------------
# Streaming fused kernel: 2N HBM traffic, DMA overlapped with compute.
# grid = (2, num_blocks): phase 0 = cache + reduce, phase 1 = normalize.
# ---------------------------------------------------------------------------
def _fused_stream_kernel(x_ref, q_ref, qmin_ref, qmax_ref, cache_ref, mm_ref,
                         *, block_rows, full_rows, tail_lanes, need_mask):
    phase = pl.program_id(0)
    i = pl.program_id(1)

    @pl.when((phase == 0) & (i == 0))
    def _():
        mm_ref[0] = jnp.float32(jnp.inf)    # running min
        mm_ref[1] = jnp.float32(-jnp.inf)   # running max

    @pl.when(phase == 0)
    def _():
        xb = x_ref[...]
        cache_ref[i] = xb                   # stash block in original dtype
        xf = xb.astype(jnp.float32)
        if need_mask:
            valid = _valid_mask(xf.shape, i * block_rows, full_rows, tail_lanes)
            xmn = jnp.where(valid, xf, jnp.float32(jnp.inf))
            xmx = jnp.where(valid, xf, jnp.float32(-jnp.inf))
        else:
            xmn = xf
            xmx = xf
        mm_ref[0] = jnp.minimum(mm_ref[0], jnp.min(xmn))
        mm_ref[1] = jnp.maximum(mm_ref[1], jnp.max(xmx))

    @pl.when(phase == 1)
    def _():
        q_min = mm_ref[0]
        q_max = mm_ref[1]
        denom = q_max - q_min
        nonzero = denom != 0.0
        scale = jnp.where(nonzero, 1.0 / jnp.where(nonzero, denom, 1.0),
                          jnp.float32(0.0))
        bias = jnp.where(nonzero, -q_min * scale, jnp.float32(1.0))
        xf = cache_ref[i].astype(jnp.float32)
        q_ref[...] = (xf * scale + bias).astype(q_ref.dtype)

        @pl.when(i == 0)
        def _():
            qmin_ref[0, 0] = q_min
            qmax_ref[0, 0] = q_max


# ---------------------------------------------------------------------------
# Two-pass tiled kernels (large inputs, 3N HBM traffic).
# ---------------------------------------------------------------------------
def _minmax_kernel(x_ref, part_ref, *, block_rows, full_rows, tail_lanes,
                   need_mask):
    """Pass 1: per-block partial (min, max) -> (num_blocks, 2) SMEM output."""
    i = pl.program_id(0)
    xf = x_ref[...].astype(jnp.float32)
    if need_mask:
        valid = _valid_mask(xf.shape, i * block_rows, full_rows, tail_lanes)
        xmn = jnp.where(valid, xf, jnp.float32(jnp.inf))
        xmx = jnp.where(valid, xf, jnp.float32(-jnp.inf))
    else:
        xmn = xf
        xmx = xf
    part_ref[0, 0] = jnp.min(xmn)
    part_ref[0, 1] = jnp.max(xmx)


def _scale_bias_kernel(sb_ref, x_ref, q_ref):
    """Pass 2: q = x * scale + bias (divide / select hoisted to the wrapper)."""
    xf = x_ref[...].astype(jnp.float32)
    q_ref[...] = (xf * sb_ref[0, 0] + sb_ref[0, 1]).astype(q_ref.dtype)


# ---------------------------------------------------------------------------
# Wrapper
# ---------------------------------------------------------------------------
def minmax_normalize(x, *, force_two_pass=False):
    """Pallas version of BatchNorm1d.forward. Returns (q, q_max, q_min)."""
    orig_shape = x.shape
    out_dtype = x.dtype if jnp.issubdtype(x.dtype, jnp.floating) else jnp.float32

    total = x.size
    if total == 0:
        # torch.min/max on an empty tensor raise; return an empty result.
        return (jnp.zeros(orig_shape, out_dtype),
                jnp.float32(jnp.nan), jnp.float32(jnp.nan))

    rows = pl.cdiv(total, _LANES)
    full_rows = total // _LANES
    tail_lanes = total % _LANES

    # Lane-dense (rows, 128) slab.  Only a <128-element pad when needed; the
    # reshape itself is a bitcast (no HBM copy).
    x_flat = x.reshape(-1)
    if tail_lanes:
        x_flat = jnp.pad(x_flat, (0, _LANES - tail_lanes))
    x2d = x_flat.reshape(rows, _LANES)

    vmem_limit = _vmem_limit_bytes()
    in_itemsize = jnp.dtype(x2d.dtype).itemsize

    # Fused-path sizing: persistent VMEM cache holds the whole (padded) input.
    blk_f = rows if rows <= _FUSED_BLOCK_ROWS else _FUSED_BLOCK_ROWS
    nblk_f = pl.cdiv(rows, blk_f)
    cache_bytes = nblk_f * blk_f * _LANES * in_itemsize
    fused = (not force_two_pass) and cache_bytes <= vmem_limit // 2

    if fused:
        need_mask = (tail_lanes != 0) or (rows % blk_f != 0)
        kernel = functools.partial(
            _fused_stream_kernel, block_rows=blk_f, full_rows=full_rows,
            tail_lanes=tail_lanes, need_mask=need_mask)
        q2d, qmin, qmax = pl.pallas_call(
            kernel,
            out_shape=(
                jax.ShapeDtypeStruct((rows, _LANES), out_dtype),
                jax.ShapeDtypeStruct((1, 1), jnp.float32),
                jax.ShapeDtypeStruct((1, 1), jnp.float32),
            ),
            grid=(2, nblk_f),
            in_specs=[
                # phase 0: stream block i; phase 1: hold the last buffer.
                pl.BlockSpec((blk_f, _LANES),
                             lambda p, i: (i * (1 - p) + (nblk_f - 1) * p, 0)),
            ],
            out_specs=(
                # phase 0: stay on block 0 (no writeback); phase 1: block i.
                pl.BlockSpec((blk_f, _LANES), lambda p, i: (i * p, 0)),
                pl.BlockSpec((1, 1), lambda p, i: (0, 0),
                             memory_space=pltpu.MemorySpace.SMEM),
                pl.BlockSpec((1, 1), lambda p, i: (0, 0),
                             memory_space=pltpu.MemorySpace.SMEM),
            ),
            scratch_shapes=[
                pltpu.VMEM((nblk_f, blk_f, _LANES), x2d.dtype),  # input cache
                pltpu.SMEM((2,), jnp.float32),                   # running min/max
            ],
            compiler_params=pltpu.CompilerParams(
                dimension_semantics=("arbitrary", "arbitrary"),
                vmem_limit_bytes=vmem_limit),
        )(x2d)
        q_min_raw = qmin[0, 0]
        q_max_raw = qmax[0, 0]
    else:
        blk = rows if rows <= _TILED_BLOCK_ROWS else _TILED_BLOCK_ROWS
        nblk = pl.cdiv(rows, blk)
        need_mask = (tail_lanes != 0) or (rows % blk != 0)

        # ---- Pass 1: per-block partial min/max (megacore-parallel) ----
        parts = pl.pallas_call(
            functools.partial(_minmax_kernel, block_rows=blk,
                              full_rows=full_rows, tail_lanes=tail_lanes,
                              need_mask=need_mask),
            out_shape=jax.ShapeDtypeStruct((nblk, 2), jnp.float32),
            grid=(nblk,),
            in_specs=[pl.BlockSpec((blk, _LANES), lambda i: (i, 0))],
            out_specs=pl.BlockSpec((1, 2), lambda i: (i, 0),
                                   memory_space=pltpu.MemorySpace.SMEM),
            compiler_params=pltpu.CompilerParams(
                dimension_semantics=("parallel",),
                vmem_limit_bytes=vmem_limit),
        )(x2d)
        q_min_raw = jnp.min(parts[:, 0])
        q_max_raw = jnp.max(parts[:, 1])

        # Degenerate-range handling + divide hoisted out of the per-element path.
        denom = q_max_raw - q_min_raw
        nonzero = denom != 0.0
        scale = jnp.where(nonzero, 1.0 / jnp.where(nonzero, denom, 1.0), 0.0)
        bias = jnp.where(nonzero, -q_min_raw * scale, 1.0)
        sb = jnp.stack([scale, bias]).astype(jnp.float32).reshape(1, 2)

        # ---- Pass 2: q = x * scale + bias ----
        q2d = pl.pallas_call(
            _scale_bias_kernel,
            out_shape=jax.ShapeDtypeStruct((rows, _LANES), out_dtype),
            grid=(nblk,),
            in_specs=[
                pl.BlockSpec((1, 2), lambda i: (0, 0),
                             memory_space=pltpu.MemorySpace.SMEM),
                pl.BlockSpec((blk, _LANES), lambda i: (i, 0)),
            ],
            out_specs=pl.BlockSpec((blk, _LANES), lambda i: (i, 0)),
            compiler_params=pltpu.CompilerParams(
                dimension_semantics=("parallel",),
                vmem_limit_bytes=vmem_limit),
        )(sb, x2d)

    if tail_lanes:
        q = q2d.reshape(-1)[:total].reshape(orig_shape)
    else:
        q = q2d.reshape(orig_shape)

    q_max_out = q_max_raw
    q_min_out = jnp.where(q_max_raw - q_min_raw != 0.0, q_min_raw,
                          jnp.float32(0.0))
    return q, q_max_out, q_min_out


if __name__ == "__main__":
    key = jax.random.PRNGKey(0)
    # BatchNorm1d-style input: (batch=2, channels=4, length=64)
    x = jax.random.normal(key, (2, 4, 64), dtype=jnp.float32)

    # Streaming-fused path (what this small input takes by default).
    q, q_max, q_min = jax.block_until_ready(minmax_normalize(x))
    # Two-pass tiled path (what large inputs take); exercised for coverage.
    q2, q_max2, q_min2 = jax.block_until_ready(
        minmax_normalize(x, force_two_pass=True))

    # Reference in plain JAX (same semantics as the PyTorch forward).
    ref_min = jnp.min(x)
    ref_max = jnp.max(x)
    ref_denom = ref_max - ref_min
    ref_q = jnp.where(ref_denom != 0.0,
                      (x - ref_min) / jnp.where(ref_denom != 0.0, ref_denom, 1.0),
                      jnp.ones_like(x))
    ref_qmin = jnp.where(ref_denom != 0.0, ref_min, jnp.float32(0.0))

    for qq, qm, qn in ((q, q_max, q_min), (q2, q_max2, q_min2)):
        assert jnp.allclose(qq, ref_q, atol=1e-5), "q mismatch"
        assert jnp.allclose(qm, ref_max, atol=1e-6), "q_max mismatch"
        assert jnp.allclose(qn, ref_qmin, atol=1e-6), "q_min mismatch"

    print("KERNEL_OK")
</pallas_src>

<mosaic_0001>
module attributes {stable_mosaic.version = 11 : i64} {
  func.func @_fused_stream_kernel(%arg0: i32, %arg1: i32, %arg2: memref<4x128xf32, #tpu.memory_space<vmem>>, %arg3: memref<4x128xf32, #tpu.memory_space<vmem>>, %arg4: memref<1x1xf32, #tpu.memory_space<smem>>, %arg5: memref<1x1xf32, #tpu.memory_space<smem>>, %arg6: memref<1x4x128xf32, #tpu.memory_space<vmem>>, %arg7: memref<2xf32, #tpu.memory_space<smem>>) attributes {dimension_semantics = [#tpu.dimension_semantics<arbitrary>, #tpu.dimension_semantics<arbitrary>], iteration_bounds = array<i64: 2, 1>, scalar_prefetch = 0 : i64, scratch_operands = 2 : i64, tpu.core_type = #tpu.core_type<tc>, window_params = [{transform_indices = @transform_0, window_bounds = array<i64: 4, 128>}, {transform_indices = @transform_1, window_bounds = array<i64: 4, 128>}, {transform_indices = @transform_2, window_bounds = array<i64: 1, 1>}, {transform_indices = @transform_3, window_bounds = array<i64: 1, 1>}]} {
    %c0_i32 = arith.constant 0 : i32
    %0 = arith.cmpi eq, %arg0, %c0_i32 : i32
    %c0_i32_0 = arith.constant 0 : i32
    %1 = arith.cmpi eq, %arg1, %c0_i32_0 : i32
    %2 = arith.andi %0, %1 : i1
    %3 = arith.extui %2 : i1 to i32
    %c0_i32_1 = arith.constant 0 : i32
    %4 = arith.cmpi ne, %3, %c0_i32_1 : i32
    scf.if %4 {
      %cst = arith.constant 0x7F800000 : f32
      %c0 = arith.constant 0 : index
      %11 = memref.load %arg7[%c0] : memref<2xf32, #tpu.memory_space<smem>>
      memref.store %cst, %arg7[%c0] : memref<2xf32, #tpu.memory_space<smem>>
      %cst_5 = arith.constant 0xFF800000 : f32
      %c1 = arith.constant 1 : index
      %12 = memref.load %arg7[%c1] : memref<2xf32, #tpu.memory_space<smem>>
      memref.store %cst_5, %arg7[%c1] : memref<2xf32, #tpu.memory_space<smem>>
    } else {
    }
    %c0_i32_2 = arith.constant 0 : i32
    %5 = arith.cmpi eq, %arg0, %c0_i32_2 : i32
    %6 = arith.extui %5 : i1 to i32
    %c0_i32_3 = arith.constant 0 : i32
    %7 = arith.cmpi ne, %6, %c0_i32_3 : i32
    scf.if %7 {
      %c0 = arith.constant 0 : index
      %c0_5 = arith.constant 0 : index
      %11 = vector.load %arg2[%c0, %c0_5] : memref<4x128xf32, #tpu.memory_space<vmem>>, vector<4x128xf32>
      %12 = arith.index_cast %arg1 : i32 to index
      %c0_6 = arith.constant 0 : index
      %c0_7 = arith.constant 0 : index
      %13 = vector.load %arg6[%12, %c0_6, %c0_7] : memref<1x4x128xf32, #tpu.memory_space<vmem>>, vector<1x4x128xf32>
      %14 = vector.shape_cast %13 : vector<1x4x128xf32> to vector<4x128xf32>
      %15 = vector.shape_cast %11 : vector<4x128xf32> to vector<1x4x128xf32>
      tpu.vector_store %arg6[%12, %c0_6, %c0_7], %15 {strides = array<i32>} : memref<1x4x128xf32, #tpu.memory_space<vmem>>, vector<1x4x128xf32>,
      %c0_8 = arith.constant 0 : index
      %16 = memref.load %arg7[%c0_8] : memref<2xf32, #tpu.memory_space<smem>>
      %17 = vector.shape_cast %11 : vector<4x128xf32> to vector<1x4x128xf32>
      %cst = arith.constant dense<0x7F800000> : vector<1xf32>
      %18 = vector.multi_reduction <minimumf>, %17, %cst [1, 2] : vector<1x4x128xf32> to vector<1xf32>
      %19 = vector.shape_cast %18 : vector<1xf32> to vector<1x1x1xf32>
      %20 = vector.extract %19[0, 0, 0] : f32 from vector<1x1x1xf32>
      %21 = arith.minimumf %16, %20 : f32
      %c0_9 = arith.constant 0 : index
      %22 = memref.load %arg7[%c0_9] : memref<2xf32, #tpu.memory_space<smem>>
      memref.store %21, %arg7[%c0_9] : memref<2xf32, #tpu.memory_space<smem>>
      %c1 = arith.constant 1 : index
      %23 = memref.load %arg7[%c1] : memref<2xf32, #tpu.memory_space<smem>>
      %24 = vector.shape_cast %11 : vector<4x128xf32> to vector<1x4x128xf32>
      %cst_10 = arith.constant dense<0xFF800000> : vector<1xf32>
      %25 = vector.multi_reduction <maximumf>, %24, %cst_10 [1, 2] : vector<1x4x128xf32> to vector<1xf32>
      %26 = vector.shape_cast %25 : vector<1xf32> to vector<1x1x1xf32>
      %27 = vector.extract %26[0, 0, 0] : f32 from vector<1x1x1xf32>
      %28 = arith.maximumf %23, %27 : f32
      %c1_11 = arith.constant 1 : index
      %29 = memref.load %arg7[%c1_11] : memref<2xf32, #tpu.memory_space<smem>>
      memref.store %28, %arg7[%c1_11] : memref<2xf32, #tpu.memory_space<smem>>
    } else {
    }
    %c1_i32 = arith.constant 1 : i32
    %8 = arith.cmpi eq, %arg0, %c1_i32 : i32
    %9 = arith.extui %8 : i1 to i32
    %c0_i32_4 = arith.constant 0 : i32
    %10 = arith.cmpi ne, %9, %c0_i32_4 : i32
    scf.if %10 {
      %c0 = arith.constant 0 : index
      %11 = memref.load %arg7[%c0] : memref<2xf32, #tpu.memory_space<smem>>
      %c1 = arith.constant 1 : index
      %12 = memref.load %arg7[%c1] : memref<2xf32, #tpu.memory_space<smem>>
      %13 = arith.subf %12, %11 : f32
      %cst = arith.constant 0.000000e+00 : f32
      %14 = arith.cmpf one, %13, %cst : f32
      %cst_5 = arith.constant 1.000000e+00 : f32
      %15 = arith.select %14, %13, %cst_5 : f32
      %cst_6 = arith.constant 1.000000e+00 : f32
      %16 = arith.divf %cst_6, %15 : f32
      %cst_7 = arith.constant 0.000000e+00 : f32
      %17 = arith.select %14, %16, %cst_7 : f32
      %cst_8 = arith.constant 0.000000e+00 : f32
      %18 = arith.subf %cst_8, %11 : f32
      %19 = arith.mulf %18, %17 : f32
      %cst_9 = arith.constant 1.000000e+00 : f32
      %20 = arith.select %14, %19, %cst_9 : f32
      %21 = arith.index_cast %arg1 : i32 to index
      %c0_10 = arith.constant 0 : index
      %c0_11 = arith.constant 0 : index
      %22 = vector.load %arg6[%21, %c0_10, %c0_11] : memref<1x4x128xf32, #tpu.memory_space<vmem>>, vector<1x4x128xf32>
      %23 = vector.shape_cast %22 : vector<1x4x128xf32> to vector<4x128xf32>
      %24 = vector.broadcast %17 : f32 to vector<4x128xf32>
      %25 = arith.mulf %23, %24 : vector<4x128xf32>
      %26 = vector.broadcast %20 : f32 to vector<4x128xf32>
      %27 = arith.addf %25, %26 : vector<4x128xf32>
      %c0_12 = arith.constant 0 : index
      %c0_13 = arith.constant 0 : index
      %28 = vector.load %arg3[%c0_12, %c0_13] : memref<4x128xf32, #tpu.memory_space<vmem>>, vector<4x128xf32>
      tpu.vector_store %arg3[%c0_12, %c0_13], %27 {strides = array<i32>} : memref<4x128xf32, #tpu.memory_space<vmem>>, vector<4x128xf32>,
      %c0_i32_14 = arith.constant 0 : i32
      %29 = arith.cmpi eq, %arg1, %c0_i32_14 : i32
      %30 = arith.extui %29 : i1 to i32
      %c0_i32_15 = arith.constant 0 : i32
      %31 = arith.cmpi ne, %30, %c0_i32_15 : i32
      scf.if %31 {
        %c0_16 = arith.constant 0 : index
        %c0_17 = arith.constant 0 : index
        %32 = memref.load %arg4[%c0_16, %c0_17] : memref<1x1xf32, #tpu.memory_space<smem>>
        memref.store %11, %arg4[%c0_16, %c0_17] : memref<1x1xf32, #tpu.memory_space<smem>>
        %c0_18 = arith.constant 0 : index
        %c0_19 = arith.constant 0 : index
        %33 = memref.load %arg5[%c0_18, %c0_19] : memref<1x1xf32, #tpu.memory_space<smem>>
        memref.store %12, %arg5[%c0_18, %c0_19] : memref<1x1xf32, #tpu.memory_space<smem>>
      } else {
      }
    } else {
    }
    return
  }
  func.func @transform_0(%arg0: i32, %arg1: i32) -> (i32, i32) {
    %c1_i32 = arith.constant 1 : i32
    %0 = arith.subi %c1_i32, %arg0 : i32
    %1 = arith.muli %arg1, %0 : i32
    %c0_i32 = arith.constant 0 : i32
    %2 = arith.muli %c0_i32, %arg0 : i32
    %3 = arith.addi %1, %2 : i32
    %c0_i32_0 = arith.constant 0 : i32
    %c0_i32_1 = arith.constant 0 : i32
    return %3, %c0_i32_0 : i32, i32
  }
  func.func @transform_1(%arg0: i32, %arg1: i32) -> (i32, i32) {
    %0 = arith.muli %arg1, %arg0 : i32
    %c0_i32 = arith.constant 0 : i32
    %c0_i32_0 = arith.constant 0 : i32
    return %0, %c0_i32 : i32, i32
  }
  func.func @transform_2(%arg0: i32, %arg1: i32) -> (i32, i32) {
    %c0_i32 = arith.constant 0 : i32
    %c0_i32_0 = arith.constant 0 : i32
    %c0_i32_1 = arith.constant 0 : i32
    return %c0_i32, %c0_i32_0 : i32, i32
  }
  func.func @transform_3(%arg0: i32, %arg1: i32) -> (i32, i32) {
    %c0_i32 = arith.constant 0 : i32
    %c0_i32_0 = arith.constant 0 : i32
    %c0_i32_1 = arith.constant 0 : i32
    return %c0_i32, %c0_i32_0 : i32, i32
  }
}

</mosaic_0001>

<llo_original>
// kernel: tpu_custom_call.1
$region0: #{tpu_custom_call.1}
  #allocation0 [shape = 'u32[]', space=smem, size = 0x4, offset = 0x4, fixed_abs, tag = 'smem constant byte address 0x4 - core index']
  #allocation1 [shape = 'u32[72,128]{1,0:T(1,128)}', space=vmem, size = 0x9000, scoped, tag = 'internal scratch']
  #allocation2 [shape = 'f32[1,4,128]{2,1,0:T(4,128)}', space=vmem, size = 0x800, scoped, tag = 'scratch operand']
  #allocation3 [shape = 'f32[2]{0:T(128)}', space=smem, size = 0x200, scoped, tag = 'scratch operand']
  %s0 = inlined_call_operand.hbm [shape: f32[4,128], index: 0, kind: input, shape index: {}]
  %s1 = inlined_call_operand.hbm [shape: f32[4,128], index: 1, kind: output, shape index: {0}]
  %s2 = inlined_call_operand.hbm [shape: f32[1,1], index: 2, kind: output, shape index: {1}]
  %s3 = inlined_call_operand.hbm [shape: f32[1,1], index: 3, kind: output, shape index: {2}]
  %4 = xla_tuple %s1, %s2, %s3
  %s5 = sld [smem:[#allocation0]]
  $region73: #{tpu_custom_call.1} parent=0
    _
  %s7 = ssub.s32 1, %s5
  %s8 = scalar_select 0, %s7, %s5
  $region1: #{tpu_custom_call.1} parent=0
    #allocation4 [shape = 'u8[4096]{0}', space=vmem, size = 0x1000, scoped, tag = 'input window, operand 0']
    #allocation5 [shape = 's32[2]{0}', space=sflag, size = 0x8, scoped, tag = 'scoped memory for tpu_custom_call.1']
    #allocation6 [shape = 's32[2]{0}', space=sflag, size = 0x8, scoped, tag = 'scoped memory for tpu_custom_call.1']
    #allocation7 [shape = 's32[2]{0}', space=sflag, size = 0x8, scoped, tag = 'scoped memory for tpu_custom_call.1']
    #allocation8 [shape = 'u8[4096]{0}', space=vmem, size = 0x1000, scoped, tag = 'output window, operand 0']
    #allocation9 [shape = 'u8[512]{0}', space=smem, size = 0x200, scoped, tag = 'output window, operand 1, single buffered']
    #allocation10 [shape = 'u8[512]{0}', space=smem, size = 0x200, scoped, tag = 'output window, operand 2, single buffered']
    #allocation11 [shape = 's32[1]{0}', space=sflag, size = 0x4, scoped, tag = 'scoped memory for tpu_custom_call.1']
    %9 = vsyncpa [#allocation5], 0
    %s10 = scalar_lea.sflag [#allocation5], 1
    %11 = vsyncpa %s10, 0
    %12 = vsyncpa [#allocation6], 0
    %s13 = scalar_lea.sflag [#allocation6], 1
    %14 = vsyncpa %s13, 0
    %15 = vsyncpa [#allocation7], 0
    %16 = vsyncpa [#allocation11], 0
    loop: start=0, step=1, limit=4
    $region2: #{tpu_custom_call.1} parent=1 // loop_pre_header
      _
    $region3: #{tpu_custom_call.1} parent=1 // loop_header
      %s18 = sphi 0, %s22
      %p19 = scmp.ge.s32.totalorder %s18, 4
      %s25 = sphi 0, %s37
      %s26 = sphi 0, %s33
      %s27 = sphi 0, %s25
      %s28 = sphi 0, %s26
      %s29 = sphi 0, %s27
      %s30 = sphi 0, %s28
      %s44 = sphi 0, %s46
      %s47 = sphi 0, %s44
      %s48 = sphi 0, %s47
      %s64 = sphi 0, %s48
      %s72 = sphi 0, %s74
      %s75 = sphi 0, %s72
      %s76 = sphi 0, %s75
      %s92 = sphi 0, %s76
      %s96 = sphi 0, %s96
      %s98 = sphi 0, %s96
      %s99 = sphi 0, %s98
      %s113 = sphi 0, %s99
      %s117 = sphi 0, %s117
      %s119 = sphi 0, %s117
      %s120 = sphi 0, %s119
      %s134 = sphi 0, %s120
    $region4: #{tpu_custom_call.1} parent=1 // loop_header_branch
      %21 = sbr.rel (%p19) target = $region8
    $region5: #{tpu_custom_call.1} parent=1 // loop_body
      %s23 = ssub.s32 %s18, 1
      %s24 = ssub.s32 %s18, 2
      %s31 = sadd.s32 1, %s26
      %p32 = scmp.ge.s32.totalorder %s31, 1
      %s33 = scalar_select %p32, 0, %s31
      %s34 = sadd.s32 1, %s25
      %s35 = scalar_select %p32, %s34, %s25
      %p36 = scmp.ge.s32.totalorder %s35, 2
      %s37 = scalar_select %p36, 0, %s35
      %s38 = ssub.s32 1, %s25
      %s39 = smul.u32 %s26, %s38
      %s40 = ssub.s32 1, %s37
      %s41 = smul.u32 %s33, %s40
      %s42 = ssub.s32 %s39, %s41
      %p43 = scmp.eq.s32.totalorder %s42, 0
      %s45 = sadd.s32 %s44, 1
      %s46 = scalar_select %p43, %s44, %s45
      %p49 = pneg %p43
      %p50 = scmp.eq.s32.totalorder %s18, 1
      %p51 = por %p49, %p50
      %p52 = scmp.ne.s32.totalorder %s44, %s47
      %p53 = scmp.eq.s32.totalorder %s18, 0
      %p54 = por %p52, %p53
      %p55 = scmp.ne.s32.totalorder %s44, %s47
      %p56 = scmp.eq.s32.totalorder %s23, 1
      %p57 = por %p55, %p56
      %p58 = scmp.ne.s32.totalorder %s47, %s48
      %p59 = scmp.eq.s32.totalorder %s23, 0
      %p60 = por %p58, %p59
      %p61 = scmp.ne.s32.totalorder %s47, %s48
      %p62 = scmp.eq.s32.totalorder %s24, 1
      %p63 = por %p61, %p62
      %p65 = scmp.ne.s32.totalorder %s48, %s64
      %p66 = scmp.eq.s32.totalorder %s24, 0
      %p67 = por %p65, %p66
      %s68 = smul.u32 %s26, %s25
      %s69 = smul.u32 %s33, %s37
      %s70 = ssub.s32 %s68, %s69
      %p71 = scmp.eq.s32.totalorder %s70, 0
      %s73 = sadd.s32 %s72, 1
      %s74 = scalar_select %p71, %s72, %s73
      %p77 = pneg %p71
      %p78 = scmp.eq.s32.totalorder %s18, 1
      %p79 = por %p77, %p78
      %p80 = scmp.ne.s32.totalorder %s72, %s75
      %p81 = scmp.eq.s32.totalorder %s18, 0
      %p82 = por %p80, %p81
      %p83 = scmp.ne.s32.totalorder %s72, %s75
      %p84 = scmp.eq.s32.totalorder %s23, 1
      %p85 = por %p83, %p84
      %p86 = scmp.ne.s32.totalorder %s75, %s76
      %p87 = scmp.eq.s32.totalorder %s23, 0
      %p88 = por %p86, %p87
      %p89 = scmp.ne.s32.totalorder %s75, %s76
      %p90 = scmp.eq.s32.totalorder %s24, 1
      %p91 = por %p89, %p90
      %p93 = scmp.ne.s32.totalorder %s76, %s92
      %p94 = scmp.eq.s32.totalorder %s24, 0
      %p95 = por %p93, %p94
      %s97 = sadd.s32 %s96, 1
      %p100 = scmp.eq.s32.totalorder %s18, 1
      %p101 = scmp.ne.s32.totalorder %s96, %s98
      %p102 = scmp.eq.s32.totalorder %s18, 0
      %p103 = por %p101, %p102
      %p104 = scmp.ne.s32.totalorder %s96, %s98
      %p105 = scmp.eq.s32.totalorder %s23, 1
      %p106 = por %p104, %p105
      %p107 = scmp.ne.s32.totalorder %s98, %s99
      %p108 = scmp.eq.s32.totalorder %s23, 0
      %p109 = por %p107, %p108
      %p110 = scmp.ne.s32.totalorder %s98, %s99
      %p111 = scmp.eq.s32.totalorder %s24, 1
      %p112 = por %p110, %p111
      %p114 = scmp.ne.s32.totalorder %s99, %s113
      %p115 = scmp.eq.s32.totalorder %s24, 0
      %p116 = por %p114, %p115
      %s118 = sadd.s32 %s117, 1
      %p121 = scmp.eq.s32.totalorder %s18, 1
      %p122 = scmp.ne.s32.totalorder %s117, %s119
      %p123 = scmp.eq.s32.totalorder %s18, 0
      %p124 = por %p122, %p123
      %p125 = scmp.ne.s32.totalorder %s117, %s119
      %p126 = scmp.eq.s32.totalorder %s23, 1
      %p127 = por %p125, %p126
      %p128 = scmp.ne.s32.totalorder %s119, %s120
      %p129 = scmp.eq.s32.totalorder %s23, 0
      %p130 = por %p128, %p129
      %p131 = scmp.ne.s32.totalorder %s119, %s120
      %p132 = scmp.eq.s32.totalorder %s24, 1
      %p133 = por %p131, %p132
      %p135 = scmp.ne.s32.totalorder %s120, %s134
      %p136 = scmp.eq.s32.totalorder %s24, 0
      %p137 = por %p135, %p136
      %p138 = scmp.le.s32.totalorder 1, %s18
      %p139 = scmp.lt.s32.totalorder %s18, 3
      %p140 = pnand %p138, %p139
      %p141 = pneg %p140
      // Predicated region
      $region9: #{tpu_custom_call.1} parent=5 // pred_check
        _
      $region10: #{tpu_custom_call.1} parent=5 // pred_check_branch
        %143 = sbr.rel (%p140) target = $region12
      $region11: #{tpu_custom_call.1} parent=5 // pred_region
        %s144 = ssub.s32 %s18, 1
      $region12: #{tpu_custom_call.1} parent=5 // pred_fallthru
        _
      %p145 = scmp.lt.s32.totalorder %s18, 2
      // Predicated region
      $region13: #{tpu_custom_call.1} parent=5 // pred_check
        %p146 = pneg %p145
      $region14: #{tpu_custom_call.1} parent=5 // pred_check_branch
        %148 = sbr.rel (%p146) target = $region16
      $region15: #{tpu_custom_call.1} parent=5 // pred_region
        // Predicated region
        $region17: #{tpu_custom_call.1} parent=15 // pred_check
          %p149 = pneg %p54
        $region18: #{tpu_custom_call.1} parent=15 // pred_check_branch
          %151 = sbr.rel (%p149) target = $region20
        $region19: #{tpu_custom_call.1} parent=15 // pred_region
          %s152 = sand.u32 %s44, 1
          %s153 = scalar_lea.sflag [#allocation5], %s152
          %s154 = sand.u32 %s44, 1
          %s155 = smul.addr %s154, 4
          %s156 = scalar_lea.vmem [#allocation4], %s155
          %s157 = ssub.s32 1, %s25
          %s158 = smul.u32 %s26, %s157
          %160 = vsyncadd %s153, 0
          %s161 = smul.addr %s158, 4
          %s162 = scalar_lea.hbm %s0, %s161
          %s164 = sshll.u32 %s162, 4
          %s165 = int_to_ptr.hbm [resolvable:$true] %s164
          %s166 = sshll.u32 %s156, 4
          %s167 = int_to_ptr.vmem [resolvable:$true] %s166
          %169 = dma.hbm_to_vmem [thread:$0]  %s165, 64, %s167, %s153
        $region20: #{tpu_custom_call.1} parent=15 // pred_fallthru
          _
      $region16: #{tpu_custom_call.1} parent=5 // pred_fallthru
        _
      %p170 = scmp.le.s32.totalorder 1, %s18
      %p171 = scmp.lt.s32.totalorder %s18, 3
      %p172 = pnand %p170, %p171
      %p173 = pneg %p172
      // Predicated region
      $region21: #{tpu_custom_call.1} parent=5 // pred_check
        _
      $region22: #{tpu_custom_call.1} parent=5 // pred_check_branch
        %175 = sbr.rel (%p172) target = $region24
      $region23: #{tpu_custom_call.1} parent=5 // pred_region
        %s176 = ssub.s32 %s18, 1
        %s177 = sand.u32 %s47, 1
        %s178 = scalar_lea.sflag [#allocation5], %s177
        %s179 = sand.u32 %s47, 1
        %s180 = smul.addr %s179, 4
        %s181 = scalar_lea.vmem [#allocation4], %s180
        // Predicated region
        $region25: #{tpu_custom_call.1} parent=23 // pred_check
          %p182 = pneg %p60
        $region26: #{tpu_custom_call.1} parent=23 // pred_check_branch
          %184 = sbr.rel (%p182) target = $region28
        $region27: #{tpu_custom_call.1} parent=23 // pred_region
          %186 = dma.done %s178, 64
        $region28: #{tpu_custom_call.1} parent=23 // pred_fallthru
          _
        %s187 = sand.u32 %s47, 1
        %s188 = scalar_lea.sflag [#allocation5], %s187
        %s189 = sand.u32 %s47, 1
        %s190 = smul.addr %s189, 4
        %s191 = scalar_lea.vmem [#allocation4], %s190
        %p192 = pneg %p60
        %p193 = pneg %p57
        %p194 = pneg %p88
        %p195 = pneg %p85
        %s196 = sand.u32 %s75, 1
        %s197 = scalar_lea.sflag [#allocation6], %s196
        %s198 = sand.u32 %s75, 1
        %s199 = smul.addr %s198, 4
        %s200 = scalar_lea.vmem [#allocation8], %s199
        %p201 = pneg %p109
        %p202 = pneg %p106
        %p203 = pneg %p130
        %p204 = pneg %p127
        %s205 = ssub.s32 1, %s27
        %s206 = smul.u32 %s28, %s205
        %s207 = smul.u32 %s28, %s27
        %p208 = scmp.eq.s32.totalorder %s27, 0
        %p209 = scmp.eq.s32.totalorder %s28, 0
        %p210 = pnand %p208, %p209
        %p211 = pneg %p210
        // Predicated region
        $region29: #{tpu_custom_call.1} parent=23 // pred_check
          _
        $region30: #{tpu_custom_call.1} parent=23 // pred_check_branch
          %213 = sbr.rel (%p210) target = $region32
        $region31: #{tpu_custom_call.1} parent=23 // pred_region
          %s214 = scalar_lea.smem [#allocation3], 0
          %215 = sst [smem:[%s214]] inf
          %s216 = scalar_lea.smem [#allocation3], 1
          %217 = sst [smem:[%s216]] -inf
        $region32: #{tpu_custom_call.1} parent=23 // pred_fallthru
          _
        // Predicated region
        $region33: #{tpu_custom_call.1} parent=23 // pred_check
          %p218 = pneg %p208
        $region34: #{tpu_custom_call.1} parent=23 // pred_check_branch
          %220 = sbr.rel (%p218) target = $region36
        $region35: #{tpu_custom_call.1} parent=23 // pred_region
          %v221 = vld [vmem:[%s181] sm:$0xf]
          %s222 = smul.u32 %s28, 4
          %s223 = scalar_lea.vmem [#allocation2], %s222
          %224 = vst [vmem:[%s223] sm:$0xf] %v221
          %s225 = sld [smem:[#allocation3]]
          %vm226 = vcmask 1043456
          %v227 = vsel %vm226, %v221, inf
          %228 = vmin.xlane.f32.xlu0 %v227
          %v229 = vpop.xlane.xlu0 %228
          %v230 = vrot.slane %v229, 4
          %v231 = vmin.f32 %v229, %v230
          %v232 = vrot.slane %v231, 2
          %v233 = vmin.f32 %v231, %v232
          %v234 = vrot.slane %v233, 1
          %v235 = vmin.f32 %v233, %v234
          %s236 = vtos %v235
          %s237 = smin.f32 %s225, %s236
          %s238 = scalar_lea.smem [#allocation3], 0
          %239 = sst [smem:[%s238]] %s237
          %s240 = sld [smem:[#allocation3 + $0x1]]
          %v241 = vsel %vm226, %v221, -inf
          %242 = vmax.xlane.f32.xlu0 %v241
          %v243 = vpop.xlane.xlu0 %242
          %v244 = vrot.slane %v243, 4
          %v245 = vmax.f32 %v243, %v244
          %v246 = vrot.slane %v245, 2
          %v247 = vmax.f32 %v245, %v246
          %v248 = vrot.slane %v247, 1
          %v249 = vmax.f32 %v247, %v248
          %s250 = vtos %v249
          %s251 = smax.f32 %s240, %s250
          %s252 = scalar_lea.smem [#allocation3], 1
          %253 = sst [smem:[%s252]] %s251
        $region36: #{tpu_custom_call.1} parent=23 // pred_fallthru
          _
        %p254 = scmp.eq.s32.totalorder %s27, 1
        // Predicated region
        $region37: #{tpu_custom_call.1} parent=23 // pred_check
          %p255 = pneg %p254
        $region38: #{tpu_custom_call.1} parent=23 // pred_check_branch
          %257 = sbr.rel (%p255) target = $region40
        $region39: #{tpu_custom_call.1} parent=23 // pred_region
          %s258 = sld [smem:[#allocation3]]
          %s259 = sld [smem:[#allocation3 + $0x1]]
          %s260 = ssub.f32 %s259, %s258
          %p261 = scmp.ne.f32.partialorder %s260, 0.0
          %s262 = scalar_select %p261, %s260, 1.0
          %v263 = vstv %s262
          %v264 = vrcp.pop %v263
          %v265 = vmul.f32 %v263, %v264
          %v266 = vsub.f32 1.0, %v265
          %v267 = vmul.f32 %v264, %v266
          %v268 = vadd.f32 %v264, %v267
          %vm269 = vweird.f32 %v263
          %vm270 = vweird.f32 %v264
          %vm271 = vmor %vm269, %vm270
          %v272 = vsel %vm271, %v264, %v268
          %v273 = vand.u32 2147483647, %v263
          %vm274 = vcmp.eq.f32.partialorder %v273, 8.507059e+37
          %v275 = vand.u32 %v263, 2147483648
          %v276 = vor.u32 1.1754944e-38, %v275
          %v277 = vsel %vm274, %v276, %v272
          %s278 = vtos %v277
          %s279 = scalar_select %p261, %s278, 0.0
          %s280 = ssub.f32 0.0, %s258
          %s281 = smul.f32 %s280, %s279
          %s282 = scalar_select %p261, %s281, 1.0
          %s283 = smul.u32 %s28, 4
          %s284 = scalar_lea.vmem [#allocation2], %s283
          %v285 = vld [vmem:[%s284] sm:$0xf]
          %v286 = vstv %s279
          %v287 = vmul.f32 %v285, %v286
          %v288 = vstv %s282
          %v289 = vadd.f32 %v287, %v288
          %290 = vst [vmem:[%s200] sm:$0xf] %v289
          // Predicated region
          $region41: #{tpu_custom_call.1} parent=39 // pred_check
            %p291 = pneg %p209
          $region42: #{tpu_custom_call.1} parent=39 // pred_check_branch
            %293 = sbr.rel (%p291) target = $region44
          $region43: #{tpu_custom_call.1} parent=39 // pred_region
            %s294 = scalar_lea.smem [#allocation9], 0
            %295 = sst [smem:[%s294]] %s258
            %s296 = scalar_lea.smem [#allocation10], 0
            %297 = sst [smem:[%s296]] %s259
          $region44: #{tpu_custom_call.1} parent=39 // pred_fallthru
            _
        $region40: #{tpu_custom_call.1} parent=23 // pred_fallthru
          _
        %s298 = sand.u32 %s75, 1
        %s299 = scalar_lea.sflag [#allocation6], %s298
        %s300 = sand.u32 %s75, 1
        %s301 = smul.addr %s300, 4
        %s302 = scalar_lea.vmem [#allocation8], %s301
        // Predicated region
        $region45: #{tpu_custom_call.1} parent=23 // pred_check
          %p303 = pneg %p85
        $region46: #{tpu_custom_call.1} parent=23 // pred_check_branch
          %305 = sbr.rel (%p303) target = $region48
        $region47: #{tpu_custom_call.1} parent=23 // pred_region
          %s306 = smul.u32 %s28, %s27
          %308 = vsyncadd %s299, 0
          %s309 = smul.addr %s306, 4
          %s310 = scalar_lea.hbm %s1, %s309
          %s312 = sshll.u32 %s302, 4
          %s313 = int_to_ptr.vmem [resolvable:$true] %s312
          %s314 = sshll.u32 %s310, 4
          %s315 = int_to_ptr.hbm [resolvable:$true] %s314
          %317 = dma.vmem_to_hbm [thread:$0]  %s313, 64, %s315, %s299
        $region48: #{tpu_custom_call.1} parent=23 // pred_fallthru
          _
        // Predicated region
        $region49: #{tpu_custom_call.1} parent=23 // pred_check
          %p318 = pneg %p106
        $region50: #{tpu_custom_call.1} parent=23 // pred_check_branch
          %320 = sbr.rel (%p318) target = $region52
        $region51: #{tpu_custom_call.1} parent=23 // pred_region
          %322 = vsyncadd [#allocation7], 0
          %s324 = sshll.u32 %s2, 4
          %s325 = int_to_ptr.hbm [resolvable:$true] %s324
          %327 = dma.smem_to_hbm [#allocation9], 16, %s325, [#allocation7]
        $region52: #{tpu_custom_call.1} parent=23 // pred_fallthru
          _
        // Predicated region
        $region53: #{tpu_custom_call.1} parent=23 // pred_check
          %p328 = pneg %p127
        $region54: #{tpu_custom_call.1} parent=23 // pred_check_branch
          %330 = sbr.rel (%p328) target = $region56
        $region55: #{tpu_custom_call.1} parent=23 // pred_region
          %332 = vsyncadd [#allocation11], 0
          %s334 = sshll.u32 %s3, 4
          %s335 = int_to_ptr.hbm [resolvable:$true] %s334
          %337 = dma.smem_to_hbm [#allocation10], 16, %s335, [#allocation11]
        $region56: #{tpu_custom_call.1} parent=23 // pred_fallthru
          _
        // Predicated region
        $region57: #{tpu_custom_call.1} parent=23 // pred_check
          %p338 = pneg %p106
        $region58: #{tpu_custom_call.1} parent=23 // pred_check_branch
          %340 = sbr.rel (%p338) target = $region60
        $region59: #{tpu_custom_call.1} parent=23 // pred_region
          %342 = dma.done [#allocation7], 16
        $region60: #{tpu_custom_call.1} parent=23 // pred_fallthru
          _
        // Predicated region
        $region61: #{tpu_custom_call.1} parent=23 // pred_check
          %p343 = pneg %p127
        $region62: #{tpu_custom_call.1} parent=23 // pred_check_branch
          %345 = sbr.rel (%p343) target = $region64
        $region63: #{tpu_custom_call.1} parent=23 // pred_region
          %347 = dma.done [#allocation11], 16
        $region64: #{tpu_custom_call.1} parent=23 // pred_fallthru
          _
        %348 = sfence
      $region24: #{tpu_custom_call.1} parent=5 // pred_fallthru
        _
      %p349 = scmp.le.s32.totalorder 2, %s18
      // Predicated region
      $region65: #{tpu_custom_call.1} parent=5 // pred_check
        %p350 = pneg %p349
      $region66: #{tpu_custom_call.1} parent=5 // pred_check_branch
        %352 = sbr.rel (%p350) target = $region68
      $region67: #{tpu_custom_call.1} parent=5 // pred_region
        %s353 = ssub.s32 %s18, 2
        // Predicated region
        $region69: #{tpu_custom_call.1} parent=67 // pred_check
          %p354 = pneg %p91
        $region70: #{tpu_custom_call.1} parent=67 // pred_check_branch
          %356 = sbr.rel (%p354) target = $region72
        $region71: #{tpu_custom_call.1} parent=67 // pred_region
          %s357 = sand.u32 %s76, 1
          %s358 = scalar_lea.sflag [#allocation6], %s357
          %s359 = sand.u32 %s76, 1
          %s360 = smul.addr %s359, 4
          %s361 = scalar_lea.vmem [#allocation8], %s360
          %363 = dma.done %s358, 64
        $region72: #{tpu_custom_call.1} parent=67 // pred_fallthru
          _
      $region68: #{tpu_custom_call.1} parent=5 // pred_fallthru
        _
    $region6: #{tpu_custom_call.1} parent=1 // loop_footer
      %s22 = sadd.s32 1, %s18
    $region7: #{tpu_custom_call.1} parent=1 // loop_footer_branch
      %17 = sbr.rel target = $region3
    $region8: #{tpu_custom_call.1} parent=1 // loop_exit
      _
    %364 = vsyncpa [#allocation5], 1
    %s365 = scalar_lea.sflag [#allocation5], 1
    %366 = vsyncpa %s365, 1
    %367 = vsyncpa [#allocation6], 1
    %s368 = scalar_lea.sflag [#allocation6], 1
    %369 = vsyncpa %s368, 1
    %370 = vsyncpa [#allocation7], 1
    %s371 = scalar_lea.sflag [#allocation7], 1
    %372 = vsyncpa %s371, 1
    %373 = vsyncpa [#allocation11], 1

</llo_original>
